<compile_context>
chip_gen: v7x
topology: tpu7x:2x2x1
jax: 0.10.0
libtpu: 0.0.40
codegen_flags: <defaults>
</compile_context>

<pallas_src>
import functools
import itertools
import math

import jax
import jax.numpy as jnp
from jax.experimental import pallas as pl
from jax.experimental.pallas import tpu as pltpu


def _round_up(x, m):
    return -(-x // m) * m


# ----------------------------------------------------------------------------
# Fused matmul + per-column affine (+residual) (+ReLU / Standout) kernel
# ----------------------------------------------------------------------------
def _mm_kernel(*refs, relu, use_res, standout):
    if use_res:
        a_ref, b_ref, scale_ref, shift_ref, res_ref, o_ref, acc_ref = refs
    else:
        a_ref, b_ref, scale_ref, shift_ref, o_ref, acc_ref = refs
        res_ref = None

    k = pl.program_id(2)

    @pl.when(k == 0)
    def _():
        acc_ref[...] = jnp.zeros_like(acc_ref)

    acc_ref[...] += jnp.dot(a_ref[...], b_ref[...],
                            preferred_element_type=jnp.float32)

    @pl.when(k == pl.num_programs(2) - 1)
    def _():
        acc = acc_ref[...]
        if standout:
            # Standout (eval): h = relu(z + b), p = sigmoid(0.5*z + 0.5), p*h
            h = jnp.maximum(acc + shift_ref[...], 0.0)
            p = jax.nn.sigmoid(0.5 * acc + 0.5)
            y = p * h
        else:
            y = acc * scale_ref[...] + shift_ref[...]
            if use_res:
                y = y + res_ref[...].astype(jnp.float32)
            if relu:
                y = jnp.maximum(y, 0.0)
        o_ref[...] = y.astype(o_ref.dtype)


@functools.partial(jax.jit, static_argnames=("relu", "standout", "out_dtype"))
def matmul_fused(a, b, scale, shift, res=None, *, relu=False, standout=False,
                 out_dtype=jnp.bfloat16):
    """out = epilogue(a @ b) ; a:(M,K), b:(K,N); bf16 operands, f32 accumulate."""
    M, K = a.shape
    _, N = b.shape

    # --- tile selection -------------------------------------------------
    TM = 256 if M >= 256 else M
    Mp = _round_up(M, TM)

    if N % 128 == 0:
        Np = N
        TN = 256 if N % 256 == 0 else 128
    elif N <= 512:
        Np, TN = N, N                      # full-extent lane block, no padding
    else:
        Np = _round_up(N, 128)
        TN = 128

    if K <= 640:
        TK = K                             # single K step, no zero padding
    else:
        TK = next((c for c in (512, 384, 256) if K % c == 0), 256)
    Kp = _round_up(K, TK)

    # --- operand prep (bf16 operands, f32 epilogue params) ---------------
    a_p = jnp.pad(a, ((0, Mp - M), (0, Kp - K))).astype(jnp.bfloat16)
    b_p = jnp.pad(b, ((0, Kp - K), (0, Np - N))).astype(jnp.bfloat16)
    scale_p = jnp.pad(scale.reshape(1, N).astype(jnp.float32),
                      ((0, 0), (0, Np - N)))
    shift_p = jnp.pad(shift.reshape(1, N).astype(jnp.float32),
                      ((0, 0), (0, Np - N)))

    inputs = [a_p, b_p, scale_p, shift_p]
    in_specs = [
        pl.BlockSpec((TM, TK), lambda i, j, k: (i, k)),
        pl.BlockSpec((TK, TN), lambda i, j, k: (k, j)),
        pl.BlockSpec((1, TN), lambda i, j, k: (0, j)),
        pl.BlockSpec((1, TN), lambda i, j, k: (0, j)),
    ]
    use_res = res is not None
    if use_res:
        res_p = jnp.pad(res, ((0, Mp - M), (0, Np - N))).astype(jnp.bfloat16)
        inputs.append(res_p)
        in_specs.append(pl.BlockSpec((TM, TN), lambda i, j, k: (i, j)))

    out = pl.pallas_call(
        functools.partial(_mm_kernel, relu=relu, use_res=use_res,
                          standout=standout),
        out_shape=jax.ShapeDtypeStruct((Mp, Np), out_dtype),
        grid_spec=pltpu.PrefetchScalarGridSpec(
            num_scalar_prefetch=0,
            grid=(Mp // TM, Np // TN, Kp // TK),
            in_specs=in_specs,
            out_specs=pl.BlockSpec((TM, TN), lambda i, j, k: (i, j)),
            scratch_shapes=[pltpu.VMEM((TM, TN), jnp.float32)],
        ),
        compiler_params=pltpu.CompilerParams(
            dimension_semantics=("parallel", "parallel", "arbitrary"),
            vmem_limit_bytes=32 * 1024 * 1024),
    )(*inputs)

    if Mp != M or Np != N:
        out = out[:M, :N]
    return out


# ----------------------------------------------------------------------------
# Row-tiled max (3x3/s2/p1 maxpool) and global average pool kernels
# ----------------------------------------------------------------------------
def _max9_kernel(*refs):
    o_ref = refs[-1]
    m = refs[0][...]
    for r in refs[1:9]:
        m = jnp.maximum(m, r[...])
    o_ref[...] = m


@jax.jit
def _maxpool_rows(*slices):            # 9 x (M, C) -> (M, C)
    M, c = slices[0].shape
    TM = 512 if M >= 512 else M
    Mp = _round_up(M, TM)
    if Mp != M:
        slices = [jnp.pad(s, ((0, Mp - M), (0, 0))) for s in slices]
    out = pl.pallas_call(
        _max9_kernel,
        out_shape=jax.ShapeDtypeStruct((Mp, c), slices[0].dtype),
        grid_spec=pltpu.PrefetchScalarGridSpec(
            num_scalar_prefetch=0,
            grid=(Mp // TM,),
            in_specs=[pl.BlockSpec((TM, c), lambda i: (i, 0))
                      for _ in range(9)],
            out_specs=pl.BlockSpec((TM, c), lambda i: (i, 0)),
        ),
        compiler_params=pltpu.CompilerParams(
            dimension_semantics=("parallel",),
            vmem_limit_bytes=32 * 1024 * 1024),
    )(*slices)
    return out[:M]


def maxpool_3x3_s2_p1(x):
    n, h, w, c = x.shape
    neg = float(jnp.finfo(x.dtype).min)
    xp = jnp.pad(x, ((0, 0), (1, 1), (1, 1), (0, 0)), constant_values=neg)
    oh = (h + 2 - 3) // 2 + 1
    ow = (w + 2 - 3) // 2 + 1
    slices = [
        xp[:, i:i + 2 * (oh - 1) + 1:2, j:j + 2 * (ow - 1) + 1:2, :]
        .reshape(n * oh * ow, c)
        for i in range(3) for j in range(3)
    ]
    return _maxpool_rows(*slices).reshape(n, oh, ow, c)


def _mean_kernel(x_ref, o_ref):
    o_ref[...] = jnp.mean(x_ref[...].astype(jnp.float32), axis=1,
                          keepdims=True)


@jax.jit
def global_avgpool(x):                 # (N, H, W, C) -> (N, C) float32
    n, h, w, c = x.shape
    x3 = x.reshape(n, h * w, c)
    out = pl.pallas_call(
        _mean_kernel,
        out_shape=jax.ShapeDtypeStruct((n, 1, c), jnp.float32),
        grid_spec=pltpu.PrefetchScalarGridSpec(
            num_scalar_prefetch=0,
            grid=(n,),
            in_specs=[pl.BlockSpec((1, h * w, c), lambda i: (i, 0, 0))],
            out_specs=pl.BlockSpec((1, 1, c), lambda i: (i, 0, 0)),
        ),
        compiler_params=pltpu.CompilerParams(
            dimension_semantics=("parallel",),
            vmem_limit_bytes=32 * 1024 * 1024),
    )(x3)
    return out[:, 0, :]


# ----------------------------------------------------------------------------
# Conv-as-im2col glue (pure slicing/reshape; all FLOPs happen in the kernel)
# ----------------------------------------------------------------------------
def _im2col(x, kh, kw, stride, pad):
    if kh == 1 and kw == 1 and pad == 0:          # 1x1 convs: no patch tensor
        if stride != 1:
            x = x[:, ::stride, ::stride, :]
        return x, x.shape[1], x.shape[2]
    if pad:
        x = jnp.pad(x, ((0, 0), (pad, pad), (pad, pad), (0, 0)))
    n, h, w, c = x.shape
    oh = (h - kh) // stride + 1
    ow = (w - kw) // stride + 1
    cols = []
    for i in range(kh):
        for j in range(kw):
            cols.append(x[:, i:i + stride * (oh - 1) + 1:stride,
                          j:j + stride * (ow - 1) + 1:stride, :])
    return jnp.concatenate(cols, axis=-1), oh, ow


def conv_bn(x, w, scale, shift, kh, kw, stride, pad, relu, res=None):
    n = x.shape[0]
    patches, oh, ow = _im2col(x, kh, kw, stride, pad)
    a = patches.reshape(n * oh * ow, -1)
    r = None if res is None else res.reshape(n * oh * ow, -1)
    y = matmul_fused(a, w, scale, shift, r, relu=relu)
    return y.reshape(n, oh, ow, -1)


# ----------------------------------------------------------------------------
# Deterministic synthetic parameters (shapes of torchvision resnet50 + heads)
# ----------------------------------------------------------------------------
def make_params(key, num_classes):
    counter = itertools.count()

    def nk():
        return jax.random.fold_in(key, next(counter))

    def conv_w(kh, kw, ic, oc):
        fan_in = kh * kw * ic
        w = (jax.random.normal(nk(), (fan_in, oc), jnp.float32)
             * math.sqrt(2.0 / fan_in))
        return w.astype(jnp.bfloat16)

    def bn(c):  # fold eval-mode BN into per-channel scale/shift (float32)
        gamma = 1.0 + 0.1 * jax.random.normal(nk(), (c,), jnp.float32)
        beta = 0.1 * jax.random.normal(nk(), (c,), jnp.float32)
        mean = 0.1 * jax.random.normal(nk(), (c,), jnp.float32)
        var = 1.0 + 0.1 * jax.random.uniform(nk(), (c,), jnp.float32)
        scale = gamma * jax.lax.rsqrt(var + 1e-5)
        shift = beta - mean * scale
        return scale, shift

    params = {
        "conv1_w": conv_w(7, 7, 3, 64),
        "bn1": bn(64),
        "abn_a": jnp.float32(0.7),   # AdaptiveBatchNorm2d.a (deterministic init)
        "abn_b": jnp.float32(0.3),   # AdaptiveBatchNorm2d.b
    }

    blocks = []
    inplanes = 64
    for planes, nblocks, stride in [(64, 3, 1), (128, 4, 2),
                                    (256, 6, 2), (512, 3, 2)]:
        for bi in range(nblocks):
            s = stride if bi == 0 else 1
            blk = {
                "conv1_w": conv_w(1, 1, inplanes, planes), "bn1": bn(planes),
                "conv2_w": conv_w(3, 3, planes, planes),   "bn2": bn(planes),
                "conv3_w": conv_w(1, 1, planes, planes * 4),
                "bn3": bn(planes * 4),
                "stride": s,
            }
            if s != 1 or inplanes != planes * 4:
                blk["ds_w"] = conv_w(1, 1, inplanes, planes * 4)
                blk["ds_bn"] = bn(planes * 4)
            blocks.append(blk)
            inplanes = planes * 4
    params["blocks"] = blocks

    params["fc1_w"] = (jax.random.normal(nk(), (2048, 1024), jnp.float32)
                       * math.sqrt(2.0 / 2048)).astype(jnp.bfloat16)
    params["fc1_b"] = 0.01 * jax.random.normal(nk(), (1024,), jnp.float32)
    params["out_w"] = (jax.random.normal(nk(), (1024, num_classes), jnp.float32)
                       * math.sqrt(1.0 / 1024)).astype(jnp.bfloat16)
    params["out_b"] = 0.01 * jax.random.normal(nk(), (num_classes,), jnp.float32)
    return params


# ----------------------------------------------------------------------------
# Forward pass
# ----------------------------------------------------------------------------
def bottleneck(x, blk):
    identity = x
    out = conv_bn(x, blk["conv1_w"], *blk["bn1"], 1, 1, 1, 0, relu=True)
    out = conv_bn(out, blk["conv2_w"], *blk["bn2"], 3, 3, blk["stride"], 1,
                  relu=True)
    if "ds_w" in blk:
        # TODO(synk): fuse the downsample conv with conv1 (shared A tile).
        identity = conv_bn(x, blk["ds_w"], *blk["ds_bn"], 1, 1, blk["stride"],
                           0, relu=False)
    # relu(bn3(conv3(out)) + identity), residual add fused into the kernel
    return conv_bn(out, blk["conv3_w"], *blk["bn3"], 1, 1, 1, 0,
                   relu=True, res=identity)


def resnet50_da_forward(params, x_nchw, adaptive_bn=False,
                        adaptive_dropout=False):
    x = jnp.transpose(x_nchw, (0, 2, 3, 1)).astype(jnp.bfloat16)  # NCHW->NHWC

    scale1, shift1 = params["bn1"]
    if adaptive_bn:  # a*x + b*bn(x) folds into a modified per-channel affine
        scale1 = params["abn_a"] + params["abn_b"] * scale1
        shift1 = params["abn_b"] * shift1
    x = conv_bn(x, params["conv1_w"], scale1, shift1, 7, 7, 2, 3, relu=True)
    x = maxpool_3x3_s2_p1(x)

    for blk in params["blocks"]:
        x = bottleneck(x, blk)

    pooled = global_avgpool(x)                       # (N, 2048) float32

    ones = jnp.ones((1024,), jnp.float32)
    if adaptive_dropout:
        # fc1 + Standout (eval) fused into the matmul epilogue.
        feat = matmul_fused(pooled, params["fc1_w"], ones, params["fc1_b"],
                            standout=True)
    else:
        feat = matmul_fused(pooled, params["fc1_w"], ones, params["fc1_b"],
                            relu=True)

    nc = params["out_w"].shape[1]
    return matmul_fused(feat, params["out_w"], jnp.ones((nc,), jnp.float32),
                        params["out_b"], out_dtype=jnp.float32)


# ----------------------------------------------------------------------------
if __name__ == "__main__":
    key = jax.random.PRNGKey(0)
    num_classes = 10
    params = make_params(key, num_classes)

    # small input consistent with ResNet50's conv1 (3 channels, NCHW)
    x = jax.random.normal(jax.random.fold_in(key, 12345), (2, 3, 32, 32),
                          jnp.float32)

    # default config (adaptive_dropout=False, adaptive_bn=False)
    logits = jax.block_until_ready(resnet50_da_forward(params, x))
    assert logits.shape == (2, num_classes)
    assert bool(jnp.all(jnp.isfinite(logits)))

    # domain-adaptive config (eval-mode AdaptiveBN + Standout)
    logits_da = jax.block_until_ready(
        resnet50_da_forward(params, x, adaptive_bn=True,
                            adaptive_dropout=True))
    assert logits_da.shape == (2, num_classes)
    assert bool(jnp.all(jnp.isfinite(logits_da)))

    print("KERNEL_OK")
</pallas_src>

<mosaic_0001>
module attributes {stable_mosaic.version = 11 : i64} {
  func.func @_mm_kernel(%arg0: i32, %arg1: i32, %arg2: i32, %arg3: memref<256x147xbf16, #tpu.memory_space<vmem>>, %arg4: memref<147x64xbf16, #tpu.memory_space<vmem>>, %arg5: memref<1x64xf32, #tpu.memory_space<vmem>>, %arg6: memref<1x64xf32, #tpu.memory_space<vmem>>, %arg7: memref<256x64xbf16, #tpu.memory_space<vmem>>, %arg8: memref<256x64xf32, #tpu.memory_space<vmem>>) attributes {dimension_semantics = [#tpu.dimension_semantics<parallel>, #tpu.dimension_semantics<parallel>, #tpu.dimension_semantics<arbitrary>], iteration_bounds = array<i64: 2, 1, 1>, scalar_prefetch = 0 : i64, scratch_operands = 1 : i64, tpu.core_type = #tpu.core_type<tc>, window_params = [{transform_indices = @transform_0, window_bounds = array<i64: 256, 147>}, {transform_indices = @transform_1, window_bounds = array<i64: 147, 64>}, {transform_indices = @transform_2, window_bounds = array<i64: 1, 64>}, {transform_indices = @transform_3, window_bounds = array<i64: 1, 64>}, {transform_indices = @transform_4, window_bounds = array<i64: 256, 64>}]} {
    %c0_i32 = arith.constant 0 : i32
    %0 = arith.cmpi eq, %arg2, %c0_i32 : i32
    %1 = arith.extui %0 : i1 to i32
    %c0_i32_0 = arith.constant 0 : i32
    %2 = arith.cmpi ne, %1, %c0_i32_0 : i32
    scf.if %2 {
      %cst_10 = arith.constant 0.000000e+00 : f32
      %12 = vector.broadcast %cst_10 : f32 to vector<256x64xf32>
      %c0_11 = arith.constant 0 : index
      %c0_12 = arith.constant 0 : index
      %13 = vector.load %arg8[%c0_11, %c0_12] : memref<256x64xf32, #tpu.memory_space<vmem>>, vector<256x64xf32>
      tpu.vector_store %arg8[%c0_11, %c0_12], %12 {strides = array<i32>} : memref<256x64xf32, #tpu.memory_space<vmem>>, vector<256x64xf32>,
    } else {
    }
    %c0 = arith.constant 0 : index
    %c0_1 = arith.constant 0 : index
    %3 = vector.load %arg8[%c0, %c0_1] : memref<256x64xf32, #tpu.memory_space<vmem>>, vector<256x64xf32>
    %c0_2 = arith.constant 0 : index
    %c0_3 = arith.constant 0 : index
    %4 = vector.load %arg3[%c0_2, %c0_3] : memref<256x147xbf16, #tpu.memory_space<vmem>>, vector<256x147xbf16>
    %c0_4 = arith.constant 0 : index
    %c0_5 = arith.constant 0 : index
    %5 = vector.load %arg4[%c0_4, %c0_5] : memref<147x64xbf16, #tpu.memory_space<vmem>>, vector<147x64xbf16>
    %cst = arith.constant dense<0.000000e+00> : vector<256x64xf32>
    %6 = tpu.matmul %4, %5, %cst {dimension_numbers = #tpu.dot_dimension_numbers<[1], [0], [0], [1], [0, 0, 1, 1], [], []>} : vector<256x147xbf16>, vector<147x64xbf16>, vector<256x64xf32> -> vector<256x64xf32>
    %7 = arith.addf %3, %6 : vector<256x64xf32>
    %c0_6 = arith.constant 0 : index
    %c0_7 = arith.constant 0 : index
    %8 = vector.load %arg8[%c0_6, %c0_7] : memref<256x64xf32, #tpu.memory_space<vmem>>, vector<256x64xf32>
    tpu.vector_store %arg8[%c0_6, %c0_7], %7 {strides = array<i32>} : memref<256x64xf32, #tpu.memory_space<vmem>>, vector<256x64xf32>,
    %c0_i32_8 = arith.constant 0 : i32
    %9 = arith.cmpi eq, %arg2, %c0_i32_8 : i32
    %10 = arith.extui %9 : i1 to i32
    %c0_i32_9 = arith.constant 0 : i32
    %11 = arith.cmpi ne, %10, %c0_i32_9 : i32
    scf.if %11 {
      %c0_10 = arith.constant 0 : index
      %c0_11 = arith.constant 0 : index
      %12 = vector.load %arg8[%c0_10, %c0_11] : memref<256x64xf32, #tpu.memory_space<vmem>>, vector<256x64xf32>
      %c0_12 = arith.constant 0 : index
      %c0_13 = arith.constant 0 : index
      %13 = vector.load %arg5[%c0_12, %c0_13] : memref<1x64xf32, #tpu.memory_space<vmem>>, vector<1x64xf32>
      %14 = vector.broadcast %13 : vector<1x64xf32> to vector<256x64xf32>
      %15 = arith.mulf %12, %14 : vector<256x64xf32>
      %c0_14 = arith.constant 0 : index
      %c0_15 = arith.constant 0 : index
      %16 = vector.load %arg6[%c0_14, %c0_15] : memref<1x64xf32, #tpu.memory_space<vmem>>, vector<1x64xf32>
      %17 = vector.broadcast %16 : vector<1x64xf32> to vector<256x64xf32>
      %18 = arith.addf %15, %17 : vector<256x64xf32>
      %cst_16 = arith.constant 0.000000e+00 : f32
      %19 = vector.broadcast %cst_16 : f32 to vector<256x64xf32>
      %20 = arith.maximumf %18, %19 : vector<256x64xf32>
      %21 = arith.truncf %20 : vector<256x64xf32> to vector<256x64xbf16>
      %c0_17 = arith.constant 0 : index
      %c0_18 = arith.constant 0 : index
      %22 = vector.load %arg7[%c0_17, %c0_18] : memref<256x64xbf16, #tpu.memory_space<vmem>>, vector<256x64xbf16>
      tpu.vector_store %arg7[%c0_17, %c0_18], %21 {strides = array<i32>} : memref<256x64xbf16, #tpu.memory_space<vmem>>, vector<256x64xbf16>,
    } else {
    }
    return
  }
  func.func @transform_0(%arg0: i32, %arg1: i32, %arg2: i32) -> (i32, i32) {
    %c0_i32 = arith.constant 0 : i32
    return %arg0, %arg2 : i32, i32
  }
  func.func @transform_1(%arg0: i32, %arg1: i32, %arg2: i32) -> (i32, i32) {
    %c0_i32 = arith.constant 0 : i32
    return %arg2, %arg1 : i32, i32
  }
  func.func @transform_2(%arg0: i32, %arg1: i32, %arg2: i32) -> (i32, i32) {
    %c0_i32 = arith.constant 0 : i32
    %c0_i32_0 = arith.constant 0 : i32
    return %c0_i32, %arg1 : i32, i32
  }
  func.func @transform_3(%arg0: i32, %arg1: i32, %arg2: i32) -> (i32, i32) {
    %c0_i32 = arith.constant 0 : i32
    %c0_i32_0 = arith.constant 0 : i32
    return %c0_i32, %arg1 : i32, i32
  }
  func.func @transform_4(%arg0: i32, %arg1: i32, %arg2: i32) -> (i32, i32) {
    %c0_i32 = arith.constant 0 : i32
    return %arg0, %arg1 : i32, i32
  }
}

</mosaic_0001>

<llo_original>
// kernel: matmul_fused.1
$region0: #{matmul_fused.1}
  #allocation0 [shape = 'u32[]', space=smem, size = 0x4, offset = 0x4, fixed_abs, tag = 'smem constant byte address 0x4 - core index']
  #allocation1 [shape = 'u32[144,128]{1,0:T(1,128)}', space=vmem, size = 0x12000, scoped, tag = 'internal scratch']
  #allocation2 [shape = 'f32[256,64]{1,0:T(8,128)}', space=vmem, size = 0x20000, scoped, tag = 'scratch operand']
  %s0 = inlined_call_operand.vmem [shape: bf16[512,147], index: 0, kind: input, shape index: {}]
  %s1 = inlined_call_operand.vmem [shape: bf16[147,64], index: 1, kind: input, shape index: {}]
  %s2 = inlined_call_operand.vmem [shape: f32[1,64], index: 2, kind: input, shape index: {}]
  %s3 = inlined_call_operand.vmem [shape: f32[1,64], index: 3, kind: input, shape index: {}]
  %s4 = inlined_call_operand.vmem [shape: bf16[512,64], index: 4, kind: output, shape index: {}]
  %s5 = sld [smem:[#allocation0]]
  $region57: #{matmul_fused.1} parent=0
    _
  %s7 = ssub.s32 1, %s5
  %s8 = scalar_select 0, %s7, %s5
  loop: start=0, step=1, limit=4
  $region2: #{matmul_fused.1} parent=0 // loop_pre_header
    _
  $region3: #{matmul_fused.1} parent=0 // loop_header
    %s10 = sphi 0, %s14
    %p11 = scmp.ge.s32.totalorder %s10, 4
    %s17 = sphi 0, %s36
    %s18 = sphi 0, %s32
    %s19 = sphi 0, %s28
    %s20 = sphi 0, %s17
    %s21 = sphi 0, %s18
    %s22 = sphi 0, %s19
    %s23 = sphi 0, %s20
    %s24 = sphi 0, %s21
    %s25 = sphi 0, %s22
    %s41 = sphi 0, %s43
    %s44 = sphi 0, %s41
    %s45 = sphi 0, %s44
    %s61 = sphi 0, %s45
    %s69 = sphi 0, %s71
    %s72 = sphi 0, %s69
    %s73 = sphi 0, %s72
    %s89 = sphi 0, %s73
    %s95 = sphi 0, %s97
    %s98 = sphi 0, %s95
    %s99 = sphi 0, %s98
    %s115 = sphi 0, %s99
    %s121 = sphi 0, %s123
    %s124 = sphi 0, %s121
    %s125 = sphi 0, %s124
    %s141 = sphi 0, %s125
    %s149 = sphi 0, %s151
    %s152 = sphi 0, %s149
    %s153 = sphi 0, %s152
    %s169 = sphi 0, %s153
  $region4: #{matmul_fused.1} parent=0 // loop_header_branch
    %13 = sbr.rel (%p11) target = $region8
  $region5: #{matmul_fused.1} parent=0 // loop_body
    %s15 = ssub.s32 %s10, 1
    %s16 = ssub.s32 %s10, 2
    %s26 = sadd.s32 1, %s19
    %p27 = scmp.ge.s32.totalorder %s26, 1
    %s28 = scalar_select %p27, 0, %s26
    %s29 = sadd.s32 1, %s18
    %s30 = scalar_select %p27, %s29, %s18
    %p31 = scmp.ge.s32.totalorder %s30, 1
    %s32 = scalar_select %p31, 0, %s30
    %s33 = sadd.s32 1, %s17
    %s34 = scalar_select %p31, %s33, %s17
    %p35 = scmp.ge.s32.totalorder %s34, 2
    %s36 = scalar_select %p35, 0, %s34
    %s37 = ssub.s32 %s17, %s36
    %s38 = ssub.s32 %s19, %s28
    %s39 = sor.u32 %s37, %s38
    %p40 = scmp.eq.s32.totalorder %s39, 0
    %s42 = sadd.s32 %s41, 1
    %s43 = scalar_select %p40, %s41, %s42
    %p46 = pneg %p40
    %p47 = scmp.eq.s32.totalorder %s10, 1
    %p48 = por %p46, %p47
    %p49 = scmp.ne.s32.totalorder %s41, %s44
    %p50 = scmp.eq.s32.totalorder %s10, 0
    %p51 = por %p49, %p50
    %p52 = scmp.ne.s32.totalorder %s41, %s44
    %p53 = scmp.eq.s32.totalorder %s15, 1
    %p54 = por %p52, %p53
    %p55 = scmp.ne.s32.totalorder %s44, %s45
    %p56 = scmp.eq.s32.totalorder %s15, 0
    %p57 = por %p55, %p56
    %p58 = scmp.ne.s32.totalorder %s44, %s45
    %p59 = scmp.eq.s32.totalorder %s16, 1
    %p60 = por %p58, %p59
    %p62 = scmp.ne.s32.totalorder %s45, %s61
    %p63 = scmp.eq.s32.totalorder %s16, 0
    %p64 = por %p62, %p63
    %s65 = ssub.s32 %s19, %s28
    %s66 = ssub.s32 %s18, %s32
    %s67 = sor.u32 %s65, %s66
    %p68 = scmp.eq.s32.totalorder %s67, 0
    %s70 = sadd.s32 %s69, 1
    %s71 = scalar_select %p68, %s69, %s70
    %p74 = pneg %p68
    %p75 = scmp.eq.s32.totalorder %s10, 1
    %p76 = por %p74, %p75
    %p77 = scmp.ne.s32.totalorder %s69, %s72
    %p78 = scmp.eq.s32.totalorder %s10, 0
    %p79 = por %p77, %p78
    %p80 = scmp.ne.s32.totalorder %s69, %s72
    %p81 = scmp.eq.s32.totalorder %s15, 1
    %p82 = por %p80, %p81
    %p83 = scmp.ne.s32.totalorder %s72, %s73
    %p84 = scmp.eq.s32.totalorder %s15, 0
    %p85 = por %p83, %p84
    %p86 = scmp.ne.s32.totalorder %s72, %s73
    %p87 = scmp.eq.s32.totalorder %s16, 1
    %p88 = por %p86, %p87
    %p90 = scmp.ne.s32.totalorder %s73, %s89
    %p91 = scmp.eq.s32.totalorder %s16, 0
    %p92 = por %p90, %p91
    %s93 = ssub.s32 %s18, %s32
    %p94 = scmp.eq.s32.totalorder %s93, 0
    %s96 = sadd.s32 %s95, 1
    %s97 = scalar_select %p94, %s95, %s96
    %p100 = pneg %p94
    %p101 = scmp.eq.s32.totalorder %s10, 1
    %p102 = por %p100, %p101
    %p103 = scmp.ne.s32.totalorder %s95, %s98
    %p104 = scmp.eq.s32.totalorder %s10, 0
    %p105 = por %p103, %p104
    %p106 = scmp.ne.s32.totalorder %s95, %s98
    %p107 = scmp.eq.s32.totalorder %s15, 1
    %p108 = por %p106, %p107
    %p109 = scmp.ne.s32.totalorder %s98, %s99
    %p110 = scmp.eq.s32.totalorder %s15, 0
    %p111 = por %p109, %p110
    %p112 = scmp.ne.s32.totalorder %s98, %s99
    %p113 = scmp.eq.s32.totalorder %s16, 1
    %p114 = por %p112, %p113
    %p116 = scmp.ne.s32.totalorder %s99, %s115
    %p117 = scmp.eq.s32.totalorder %s16, 0
    %p118 = por %p116, %p117
    %s119 = ssub.s32 %s18, %s32
    %p120 = scmp.eq.s32.totalorder %s119, 0
    %s122 = sadd.s32 %s121, 1
    %s123 = scalar_select %p120, %s121, %s122
    %p126 = pneg %p120
    %p127 = scmp.eq.s32.totalorder %s10, 1
    %p128 = por %p126, %p127
    %p129 = scmp.ne.s32.totalorder %s121, %s124
    %p130 = scmp.eq.s32.totalorder %s10, 0
    %p131 = por %p129, %p130
    %p132 = scmp.ne.s32.totalorder %s121, %s124
    %p133 = scmp.eq.s32.totalorder %s15, 1
    %p134 = por %p132, %p133
    %p135 = scmp.ne.s32.totalorder %s124, %s125
    %p136 = scmp.eq.s32.totalorder %s15, 0
    %p137 = por %p135, %p136
    %p138 = scmp.ne.s32.totalorder %s124, %s125
    %p139 = scmp.eq.s32.totalorder %s16, 1
    %p140 = por %p138, %p139
    %p142 = scmp.ne.s32.totalorder %s125, %s141
    %p143 = scmp.eq.s32.totalorder %s16, 0
    %p144 = por %p142, %p143
    %s145 = ssub.s32 %s17, %s36
    %s146 = ssub.s32 %s18, %s32
    %s147 = sor.u32 %s145, %s146
    %p148 = scmp.eq.s32.totalorder %s147, 0
    %s150 = sadd.s32 %s149, 1
    %s151 = scalar_select %p148, %s149, %s150
    %p154 = pneg %p148
    %p155 = scmp.eq.s32.totalorder %s10, 1
    %p156 = por %p154, %p155
    %p157 = scmp.ne.s32.totalorder %s149, %s152
    %p158 = scmp.eq.s32.totalorder %s10, 0
    %p159 = por %p157, %p158
    %p160 = scmp.ne.s32.totalorder %s149, %s152
    %p161 = scmp.eq.s32.totalorder %s15, 1
    %p162 = por %p160, %p161
    %p163 = scmp.ne.s32.totalorder %s152, %s153
    %p164 = scmp.eq.s32.totalorder %s15, 0
    %p165 = por %p163, %p164
    %p166 = scmp.ne.s32.totalorder %s152, %s153
    %p167 = scmp.eq.s32.totalorder %s16, 1
    %p168 = por %p166, %p167
    %p170 = scmp.ne.s32.totalorder %s153, %s169
    %p171 = scmp.eq.s32.totalorder %s16, 0
    %p172 = por %p170, %p171
    %p173 = scmp.le.s32.totalorder 1, %s10
    %p174 = scmp.lt.s32.totalorder %s10, 3
    %p175 = pnand %p173, %p174
    %p176 = pneg %p175
    // Predicated region
    $region9: #{matmul_fused.1} parent=5 // pred_check
      _
    $region10: #{matmul_fused.1} parent=5 // pred_check_branch
      %178 = sbr.rel (%p175) target = $region12
    $region11: #{matmul_fused.1} parent=5 // pred_region
      %s179 = ssub.s32 %s10, 1
      // Predicated region
      $region13: #{matmul_fused.1} parent=11 // pred_check
        %p180 = pneg %p85
      $region14: #{matmul_fused.1} parent=11 // pred_check_branch
        %182 = sbr.rel (%p180) target = $region16
      $region15: #{matmul_fused.1} parent=11 // pred_region
        %s183 = smul.u32 19, %s22
        %p184 = scmp.lt.s32.totalorder %s183, 18
        %s185 = scalar_select %p184, %s183, 18
        %p186 = scmp.lt.s32.totalorder %s21, 0
        %s187 = scalar_select %p186, %s21, 0
        %s188 = sadd.s32 %s187, %s185
        %s189 = smul.addr %s188, 4
        %s190 = scalar_lea.vmem %s1, %s189
        %s191 = smul.u32 19, %s22
      $region16: #{matmul_fused.1} parent=11 // pred_fallthru
        _
      // Predicated region
      $region17: #{matmul_fused.1} parent=11 // pred_check
        %p192 = pneg %p111
      $region18: #{matmul_fused.1} parent=11 // pred_check_branch
        %194 = sbr.rel (%p192) target = $region20
      $region19: #{matmul_fused.1} parent=11 // pred_region
        %p195 = scmp.lt.s32.totalorder %s21, 0
        %s196 = scalar_select %p195, %s21, 0
        %s197 = scalar_lea.vmem %s2, %s196
      $region20: #{matmul_fused.1} parent=11 // pred_fallthru
        _
      // Predicated region
      $region21: #{matmul_fused.1} parent=11 // pred_check
        %p198 = pneg %p137
      $region22: #{matmul_fused.1} parent=11 // pred_check_branch
        %200 = sbr.rel (%p198) target = $region24
      $region23: #{matmul_fused.1} parent=11 // pred_region
        %p201 = scmp.lt.s32.totalorder %s21, 0
        %s202 = scalar_select %p201, %s21, 0
        %s203 = scalar_lea.vmem %s3, %s202
      $region24: #{matmul_fused.1} parent=11 // pred_fallthru
        _
    $region12: #{matmul_fused.1} parent=5 // pred_fallthru
      _
    %p204 = scmp.lt.s32.totalorder %s10, 2
    // Predicated region
    $region25: #{matmul_fused.1} parent=5 // pred_check
      %p205 = pneg %p204
    $region26: #{matmul_fused.1} parent=5 // pred_check_branch
      %207 = sbr.rel (%p205) target = $region28
    $region27: #{matmul_fused.1} parent=5 // pred_region
      // Predicated region
      $region29: #{matmul_fused.1} parent=27 // pred_check
        %p208 = pneg %p51
      $region30: #{matmul_fused.1} parent=27 // pred_check_branch
        %210 = sbr.rel (%p208) target = $region32
      $region31: #{matmul_fused.1} parent=27 // pred_region
        %s211 = smul.u32 32, %s17
        %s212 = smul.u32 2, %s19
        %p213 = scmp.lt.s32.totalorder %s211, 63
        %s214 = scalar_select %p213, %s211, 63
        %p215 = scmp.lt.s32.totalorder %s212, 1
        %s216 = scalar_select %p215, %s212, 1
        %s217 = smul.addr %s214, 2
        %s218 = sadd.s32 %s216, %s217
        %s219 = smul.addr %s218, 4
        %s220 = scalar_lea.vmem %s0, %s219
        %s221 = smul.u32 32, %s17
        %s222 = smul.u32 2, %s19
      $region32: #{matmul_fused.1} parent=27 // pred_fallthru
        _
    $region28: #{matmul_fused.1} parent=5 // pred_fallthru
      _
    %p223 = scmp.le.s32.totalorder 1, %s10
    %p224 = scmp.lt.s32.totalorder %s10, 3
    %p225 = pnand %p223, %p224
    %p226 = pneg %p225
    // Predicated region
    $region33: #{matmul_fused.1} parent=5 // pred_check
      _
    $region34: #{matmul_fused.1} parent=5 // pred_check_branch
      %228 = sbr.rel (%p225) target = $region36
    $region35: #{matmul_fused.1} parent=5 // pred_region
      %s229 = ssub.s32 %s10, 1
      %s230 = smul.u32 32, %s20
      %s231 = smul.u32 2, %s22
      %p232 = scmp.lt.s32.totalorder %s230, 63
      %s233 = scalar_select %p232, %s230, 63
      %p234 = scmp.lt.s32.totalorder %s231, 1
      %s235 = scalar_select %p234, %s231, 1
      %s236 = smul.addr %s233, 2
      %s237 = sadd.s32 %s235, %s236
      %s238 = smul.addr %s237, 4
      %s239 = scalar_lea.vmem %s0, %s238
      %p240 = pneg %p57
      %p241 = pneg %p54
      %s242 = smul.u32 19, %s22
      %p243 = scmp.lt.s32.totalorder %s242, 18
      %s244 = scalar_select %p243, %s242, 18
      %p245 = scmp.lt.s32.totalorder %s21, 0
      %s246 = scalar_select %p245, %s21, 0
      %s247 = sadd.s32 %s246, %s244
      %s248 = smul.addr %s247, 4
      %s249 = scalar_lea.vmem %s1, %s248
      %p250 = pneg %p85
      %p251 = pneg %p82
      %p252 = scmp.lt.s32.totalorder %s21, 0
      %s253 = scalar_select %p252, %s21, 0
      %s254 = scalar_lea.vmem %s2, %s253
      %p255 = pneg %p111
      %p256 = pneg %p108
      %p257 = scmp.lt.s32.totalorder %s21, 0
      %s258 = scalar_select %p257, %s21, 0
      %s259 = scalar_lea.vmem %s3, %s258
      %p260 = pneg %p137
      %p261 = pneg %p134
      %p262 = pneg %p165
      %p263 = pneg %p162
      %s264 = smul.u32 32, %s20
      %p265 = scmp.lt.s32.totalorder %s264, 63
      %s266 = scalar_select %p265, %s264, 63
      %p267 = scmp.lt.s32.totalorder %s21, 0
      %s268 = scalar_select %p267, %s21, 0
      %s269 = sadd.s32 %s268, %s266
      %s270 = smul.addr %s269, 4
      %s271 = scalar_lea.vmem %s4, %s270
      %s272 = smul.u32 32, %s20
      %s273 = smul.u32 2, %s22
      %p274 = scmp.lt.s32.totalorder %s272, 63
      %s275 = scalar_select %p274, %s272, 63
      %p276 = scmp.lt.s32.totalorder %s273, 1
      %s277 = scalar_select %p276, %s273, 1
      %s278 = smul.addr %s275, 2
      %s279 = sadd.s32 %s277, %s278
      %s280 = smul.addr %s279, 4
      %s281 = scalar_lea.vmem %s0, %s280
      %s282 = smul.u32 32, %s20
      %s283 = smul.u32 2, %s22
      %s284 = smul.u32 19, %s22
      %p285 = scmp.lt.s32.totalorder %s284, 18
      %s286 = scalar_select %p285, %s284, 18
      %p287 = scmp.lt.s32.totalorder %s21, 0
      %s288 = scalar_select %p287, %s21, 0
      %s289 = sadd.s32 %s288, %s286
      %s290 = smul.addr %s289, 4
      %s291 = scalar_lea.vmem %s1, %s290
      %s292 = smul.u32 19, %s22
      %p293 = scmp.lt.s32.totalorder %s21, 0
      %s294 = scalar_select %p293, %s21, 0
      %s295 = scalar_lea.vmem %s2, %s294
      %p296 = scmp.lt.s32.totalorder %s21, 0
      %s297 = scalar_select %p296, %s21, 0
      %s298 = scalar_lea.vmem %s3, %s297
      %s299 = smul.u32 32, %s20
      %p300 = scmp.lt.s32.totalorder %s299, 63
      %s301 = scalar_select %p300, %s299, 63
      %p302 = scmp.lt.s32.totalorder %s21, 0
      %s303 = scalar_select %p302, %s21, 0
      %s304 = sadd.s32 %s303, %s301
      %s305 = smul.addr %s304, 4
      %s306 = scalar_lea.vmem %s4, %s305
      %s307 = smul.u32 32, %s20
      %p309 = scmp.eq.s32.totalorder %s22, 0
      // Predicated region
      $region37: #{matmul_fused.1} parent=35 // pred_check
        %p310 = pneg %p309
      $region38: #{matmul_fused.1} parent=35 // pred_check_branch
        %312 = sbr.rel (%p310) target = $region40
      $region39: #{matmul_fused.1} parent=35 // pred_region
        %vm313 = vcmask 523264
        %314 = vst.msk [vmem:[#allocation2] sm:$0xff] %vm313, 0.0
        %315 = vst.msk [vmem:[#allocation2 + $0x8] sm:$0xff] %vm313, 0.0
        %316 = vst.msk [vmem:[#allocation2 + $0x10] sm:$0xff] %vm313, 0.0
        %317 = vst.msk [vmem:[#allocation2 + $0x18] sm:$0xff] %vm313, 0.0
        %318 = vst.msk [vmem:[#allocation2 + $0x20] sm:$0xff] %vm313, 0.0
        %319 = vst.msk [vmem:[#allocation2 + $0x28] sm:$0xff] %vm313, 0.0
        %320 = vst.msk [vmem:[#allocation2 + $0x30] sm:$0xff] %vm313, 0.0
        %321 = vst.msk [vmem:[#allocation2 + $0x38] sm:$0xff] %vm313, 0.0
        %322 = vst.msk [vmem:[#allocation2 + $0x40] sm:$0xff] %vm313, 0.0
        %323 = vst.msk [vmem:[#allocation2 + $0x48] sm:$0xff] %vm313, 0.0
        %324 = vst.msk [vmem:[#allocation2 + $0x50] sm:$0xff] %vm313, 0.0
        %325 = vst.msk [vmem:[#allocation2 + $0x58] sm:$0xff] %vm313, 0.0
        %326 = vst.msk [vmem:[#allocation2 + $0x60] sm:$0xff] %vm313, 0.0
        %327 = vst.msk [vmem:[#allocation2 + $0x68] sm:$0xff] %vm313, 0.0
        %328 = vst.msk [vmem:[#allocation2 + $0x70] sm:$0xff] %vm313, 0.0
        %329 = vst.msk [vmem:[#allocation2 + $0x78] sm:$0xff] %vm313, 0.0
        %330 = vst.msk [vmem:[#allocation2 + $0x80] sm:$0xff] %vm313, 0.0
        %331 = vst.msk [vmem:[#allocation2 + $0x88] sm:$0xff] %vm313, 0.0
        %332 = vst.msk [vmem:[#allocation2 + $0x90] sm:$0xff] %vm313, 0.0
        %333 = vst.msk [vmem:[#allocation2 + $0x98] sm:$0xff] %vm313, 0.0
        %334 = vst.msk [vmem:[#allocation2 + $0xa0] sm:$0xff] %vm313, 0.0
        %335 = vst.msk [vmem:[#allocation2 + $0xa8] sm:$0xff] %vm313, 0.0
        %336 = vst.msk [vmem:[#allocation2 + $0xb0] sm:$0xff] %vm313, 0.0
        %337 = vst.msk [vmem:[#allocation2 + $0xb8] sm:$0xff] %vm313, 0.0
        %338 = vst.msk [vmem:[#allocation2 + $0xc0] sm:$0xff] %vm313, 0.0
        %339 = vst.msk [vmem:[#allocation2 + $0xc8] sm:$0xff] %vm313, 0.0
        %340 = vst.msk [vmem:[#allocation2 + $0xd0] sm:$0xff] %vm313, 0.0
        %341 = vst.msk [vmem:[#allocation2 + $0xd8] sm:$0xff] %vm313, 0.0
        %342 = vst.msk [vmem:[#allocation2 + $0xe0] sm:$0xff] %vm313, 0.0
        %343 = vst.msk [vmem:[#allocation2 + $0xe8] sm:$0xff] %vm313, 0.0
        %344 = vst.msk [vmem:[#allocation2 + $0xf0] sm:$0xff] %vm313, 0.0
        %345 = vst.msk [vmem:[#allocation2 + $0xf8] sm:$0xff] %vm313, 0.0
      $region40: #{matmul_fused.1} parent=35 // pred_fallthru
        _
      %v346 = vld [vmem:[#allocation2] sm:$0xff]
      %v347 = vld [vmem:[#allocation2 + $0x8] sm:$0xff]
      %v348 = vld [vmem:[#allocation2 + $0x10] sm:$0xff]
      %v349 = vld [vmem:[#allocation2 + $0x18] sm:$0xff]
      %v350 = vld [vmem:[#allocation2 + $0x20] sm:$0xff]
      %v351 = vld [vmem:[#allocation2 + $0x28] sm:$0xff]
      %v352 = vld [vmem:[#allocation2 + $0x30] sm:$0xff]
      %v353 = vld [vmem:[#allocation2 + $0x38] sm:$0xff]
      %v354 = vld [vmem:[#allocation2 + $0x40] sm:$0xff]
      %v355 = vld [vmem:[#allocation2 + $0x48] sm:$0xff]
      %v356 = vld [vmem:[#allocation2 + $0x50] sm:$0xff]
      %v357 = vld [vmem:[#allocation2 + $0x58] sm:$0xff]
      %v358 = vld [vmem:[#allocation2 + $0x60] sm:$0xff]
      %v359 = vld [vmem:[#allocation2 + $0x68] sm:$0xff]
      %v360 = vld [vmem:[#allocation2 + $0x70] sm:$0xff]
      %v361 = vld [vmem:[#allocation2 + $0x78] sm:$0xff]
      %v362 = vld [vmem:[#allocation2 + $0x80] sm:$0xff]
      %v363 = vld [vmem:[#allocation2 + $0x88] sm:$0xff]
      %v364 = vld [vmem:[#allocation2 + $0x90] sm:$0xff]
      %v365 = vld [vmem:[#allocation2 + $0x98] sm:$0xff]
      %v366 = vld [vmem:[#allocation2 + $0xa0] sm:$0xff]
      %v367 = vld [vmem:[#allocation2 + $0xa8] sm:$0xff]
      %v368 = vld [vmem:[#allocation2 + $0xb0] sm:$0xff]
      %v369 = vld [vmem:[#allocation2 + $0xb8] sm:$0xff]
      %v370 = vld [vmem:[#allocation2 + $0xc0] sm:$0xff]
      %v371 = vld [vmem:[#allocation2 + $0xc8] sm:$0xff]
      %v372 = vld [vmem:[#allocation2 + $0xd0] sm:$0xff]
      %v373 = vld [vmem:[#allocation2 + $0xd8] sm:$0xff]
      %v374 = vld [vmem:[#allocation2 + $0xe0] sm:$0xff]
      %v375 = vld [vmem:[#allocation2 + $0xe8] sm:$0xff]
      %v376 = vld [vmem:[#allocation2 + $0xf0] sm:$0xff]
      %v377 = vld [vmem:[#allocation2 + $0xf8] sm:$0xff]
      %v378 = vld [vmem:[%s281] sm:$0xff]
      %v379 = vld [vmem:[%s281 + $0x8] sm:$0xff]
      %v380 = vld [vmem:[%s281 + $0x10] sm:$0xff]
      %v381 = vld [vmem:[%s281 + $0x18] sm:$0xff]
      %v382 = vld [vmem:[%s281 + $0x20] sm:$0xff]
      %v383 = vld [vmem:[%s281 + $0x28] sm:$0xff]
      %v384 = vld [vmem:[%s281 + $0x30] sm:$0xff]
      %v385 = vld [vmem:[%s281 + $0x38] sm:$0xff]
      %v386 = vld [vmem:[%s281 + $0x40] sm:$0xff]
      %v387 = vld [vmem:[%s281 + $0x48] sm:$0xff]
      %v388 = vld [vmem:[%s281 + $0x50] sm:$0xff]
      %v389 = vld [vmem:[%s281 + $0x58] sm:$0xff]
      %v390 = vld [vmem:[%s281 + $0x60] sm:$0xff]
      %v391 = vld [vmem:[%s281 + $0x68] sm:$0xff]
      %v392 = vld [vmem:[%s281 + $0x70] sm:$0xff]
      %v393 = vld [vmem:[%s281 + $0x78] sm:$0xff]
      %v394 = vld [vmem:[%s281 + $0x80] sm:$0xff]
      %v395 = vld [vmem:[%s281 + $0x88] sm:$0xff]
      %v396 = vld [vmem:[%s281 + $0x90] sm:$0xff]
      %v397 = vld [vmem:[%s281 + $0x98] sm:$0xff]
      %v398 = vld [vmem:[%s281 + $0xa0] sm:$0xff]
      %v399 = vld [vmem:[%s281 + $0xa8] sm:$0xff]
      %v400 = vld [vmem:[%s281 + $0xb0] sm:$0xff]
      %v401 = vld [vmem:[%s281 + $0xb8] sm:$0xff]
      %v402 = vld [vmem:[%s281 + $0xc0] sm:$0xff]
      %v403 = vld [vmem:[%s281 + $0xc8] sm:$0xff]
      %v404 = vld [vmem:[%s281 + $0xd0] sm:$0xff]
      %v405 = vld [vmem:[%s281 + $0xd8] sm:$0xff]
      %v406 = vld [vmem:[%s281 + $0xe0] sm:$0xff]
      %v407 = vld [vmem:[%s281 + $0xe8] sm:$0xff]
      %v408 = vld [vmem:[%s281 + $0xf0] sm:$0xff]
      %v409 = vld [vmem:[%s281 + $0xf8] sm:$0xff]
      %v410 = vld [vmem:[%s291] sm:$0xf]
      %v411 = vld [vmem:[%s291 + $0x4] sm:$0xf]
      %v412 = vld [vmem:[%s291 + $0x8] sm:$0xf]
      %v413 = vld [vmem:[%s291 + $0xc] sm:$0xf]
      %v414 = vld [vmem:[%s291 + $0x10] sm:$0xf]
      %v415 = vld [vmem:[%s291 + $0x14] sm:$0xf]
      %v416 = vld [vmem:[%s291 + $0x18] sm:$0xf]
      %v417 = vld [vmem:[%s291 + $0x1c] sm:$0xf]
      %v418 = vld [vmem:[%s291 + $0x20] sm:$0xf]
      %v419 = vld [vmem:[%s291 + $0x24] sm:$0xf]
      %v420 = vld [vmem:[%s291 + $0x28] sm:$0xf]
      %v421 = vld [vmem:[%s291 + $0x2c] sm:$0xf]
      %v422 = vld [vmem:[%s291 + $0x30] sm:$0xf]
      %v423 = vld [vmem:[%s291 + $0x34] sm:$0xf]
      %v424 = vld [vmem:[%s291 + $0x38] sm:$0xf]
      %v425 = vld [vmem:[%s291 + $0x3c] sm:$0xf]
      %v426 = vld [vmem:[%s291 + $0x40] sm:$0xf]
      %v427 = vld [vmem:[%s291 + $0x44] sm:$0xf]
      %v428 = vld [vmem:[%s291 + $0x48] sm:$0x3]
      %v461 = vunpack.c.l.b16 %v378
      %v462 = vunpack.c.h.b16 %v378
      %v463 = vunpack.c.l.b16 %v379
      %v464 = vunpack.c.h.b16 %v379
      %v465 = vunpack.c.l.b16 %v380
      %v466 = vunpack.c.h.b16 %v380
      %v467 = vunpack.c.l.b16 %v381
      %v468 = vunpack.c.h.b16 %v381
      %v469 = vunpack.c.l.b16 %v382
      %v470 = vunpack.c.h.b16 %v382
      %v471 = vunpack.c.l.b16 %v383
      %v472 = vunpack.c.h.b16 %v383
      %v473 = vunpack.c.l.b16 %v384
      %v474 = vunpack.c.h.b16 %v384
      %v475 = vunpack.c.l.b16 %v385
      %v476 = vunpack.c.h.b16 %v385
      %v477 = vunpack.c.l.b16 %v386
      %v478 = vunpack.c.h.b16 %v386
      %v479 = vunpack.c.l.b16 %v387
      %v480 = vunpack.c.h.b16 %v387
      %v481 = vunpack.c.l.b16 %v388
      %v482 = vunpack.c.h.b16 %v388
      %v483 = vunpack.c.l.b16 %v389
      %v484 = vunpack.c.h.b16 %v389
      %v485 = vunpack.c.l.b16 %v390
      %v486 = vunpack.c.h.b16 %v390
      %v487 = vunpack.c.l.b16 %v391
      %v488 = vunpack.c.h.b16 %v391
      %v489 = vunpack.c.l.b16 %v392
      %v490 = vunpack.c.h.b16 %v392
      %v491 = vunpack.c.l.b16 %v393
      %v492 = vunpack.c.h.b16 %v393
      %v493 = vunpack.c.l.b16 %v394
      %v494 = vunpack.c.h.b16 %v394
      %v495 = vunpack.c.l.b16 %v395
      %v496 = vunpack.c.h.b16 %v395
      %v497 = vunpack.c.l.b16 %v396
      %v498 = vunpack.c.h.b16 %v396
      %v499 = vunpack.c.l.b16 %v397
      %v500 = vunpack.c.h.b16 %v397
      %v501 = vunpack.c.l.b16 %v398
      %v502 = vunpack.c.h.b16 %v398
      %v503 = vunpack.c.l.b16 %v399
      %v504 = vunpack.c.h.b16 %v399
      %v505 = vunpack.c.l.b16 %v400
      %v506 = vunpack.c.h.b16 %v400
      %v507 = vunpack.c.l.b16 %v401
      %v508 = vunpack.c.h.b16 %v401
      %v509 = vunpack.c.l.b16 %v402
      %v510 = vunpack.c.h.b16 %v402
      %v511 = vunpack.c.l.b16 %v403
      %v512 = vunpack.c.h.b16 %v403
      %v513 = vunpack.c.l.b16 %v404
      %v514 = vunpack.c.h.b16 %v404
      %v515 = vunpack.c.l.b16 %v405
      %v516 = vunpack.c.h.b16 %v405
      %v517 = vunpack.c.l.b16 %v406
      %v518 = vunpack.c.h.b16 %v406
      %v519 = vunpack.c.l.b16 %v407
      %v520 = vunpack.c.h.b16 %v407
      %v521 = vunpack.c.l.b16 %v408
      %v522 = vunpack.c.h.b16 %v408
      %v523 = vunpack.c.l.b16 %v409
      %v524 = vunpack.c.h.b16 %v409
      %v525 = vpack.c.b16 %v463, %v461
      %v526 = vpack.c.b16 %v464, %v462
      %v527 = vpack.c.b16 %v467, %v465
      %v528 = vpack.c.b16 %v468, %v466
      %v529 = vpack.c.b16 %v471, %v469
      %v530 = vpack.c.b16 %v472, %v470
      %v531 = vpack.c.b16 %v475, %v473
      %v532 = vpack.c.b16 %v476, %v474
      %v533 = vpack.c.b16 %v479, %v477
      %v534 = vpack.c.b16 %v480, %v478
      %v535 = vpack.c.b16 %v483, %v481
      %v536 = vpack.c.b16 %v484, %v482
      %v537 = vpack.c.b16 %v487, %v485
      %v538 = vpack.c.b16 %v488, %v486
      %v539 = vpack.c.b16 %v491, %v489
      %v540 = vpack.c.b16 %v492, %v490
      %v541 = vpack.c.b16 %v495, %v493
      %v542 = vpack.c.b16 %v496, %v494
      %v543 = vpack.c.b16 %v499, %v497
      %v544 = vpack.c.b16 %v500, %v498
      %v545 = vpack.c.b16 %v503, %v501
      %v546 = vpack.c.b16 %v504, %v502
      %v547 = vpack.c.b16 %v507, %v505
      %v548 = vpack.c.b16 %v508, %v506
      %v549 = vpack.c.b16 %v511, %v509
      %v550 = vpack.c.b16 %v512, %v510
      %v551 = vpack.c.b16 %v515, %v513
      %v552 = vpack.c.b16 %v516, %v514
      %v553 = vpack.c.b16 %v519, %v517
      %v554 = vpack.c.b16 %v520, %v518
      %v555 = vpack.c.b16 %v523, %v521
      %v556 = vpack.c.b16 %v524, %v522
      %v592 = vunpack.c.l.b16 %v410
      %v593 = vunpack.c.l.b16 %v411
      %v594 = vunpack.c.l.b16 %v412
      %v595 = vunpack.c.l.b16 %v413
      %v596 = vunpack.c.l.b16 %v414
      %v597 = vunpack.c.l.b16 %v415
      %v598 = vunpack.c.l.b16 %v416
      %v599 = vunpack.c.l.b16 %v417
      %v600 = vunpack.c.l.b16 %v418
      %v601 = vunpack.c.l.b16 %v419
      %v602 = vunpack.c.l.b16 %v420
      %v603 = vunpack.c.l.b16 %v421
      %v604 = vunpack.c.l.b16 %v422
      %v605 = vunpack.c.l.b16 %v423
      %v606 = vunpack.c.l.b16 %v424
      %v607 = vunpack.c.l.b16 %v425
      %v608 = vunpack.c.l.b16 %v426
      %v609 = vunpack.c.l.b16 %v427
      %v610 = vunpack.c.l.b16 %v428
      %v611 = vpack.c.b16 %v593, %v592
      %v612 = vpack.c.b16 %v595, %v594
      %v613 = vpack.c.b16 %v597, %v596
      %v614 = vpack.c.b16 %v599, %v598
      %v615 = vpack.c.b16 %v601, %v600
      %v616 = vpack.c.b16 %v603, %v602
      %v617 = vpack.c.b16 %v605, %v604
      %v618 = vpack.c.b16 %v607, %v606
      %v619 = vpack.c.b16 %v609, %v608
      %v620 = vpack.c.b16 %v610, %v610
      %vm630 = vcmask 154624
      %v632 = vsel %vm630, %v526, 0
      %v635 = vsel %vm630, %v528, 0
      %v638 = vsel %vm630, %v530, 0
      %v641 = vsel %vm630, %v532, 0
      %v644 = vsel %vm630, %v534, 0
      %v647 = vsel %vm630, %v536, 0
      %v650 = vsel %vm630, %v538, 0
      %v653 = vsel %vm630, %v540, 0
      %v656 = vsel %vm630, %v542, 0
      %v659 = vsel %vm630, %v544, 0
      %v662 = vsel %vm630, %v546, 0
      %v665 = vsel %vm630, %v548, 0
      %v668 = vsel %vm630, %v550, 0
      %v671 = vsel %vm630, %v552, 0
      %v674 = vsel %vm630, %v554, 0
      %v677 = vsel %vm630, %v556, 0
      %vm679 = vcmask 1040384
      %vm680 = vcmask 1041408
      %v681 = vsel %vm679, 4294967295, 65535
      %v682 = vsel %vm680, %v681, 0
      %v684 = vand.u32 %v620, %v682
      %686 = vmatprep.subr.bf16.mxu0 0
      %687 = vmatpush1.bf16.msra.mxu0 %v611
      %688 = vmatprep.subr.bf16.mxu0 0
      %689 = vmatpush1.bf16.msra.mxu0 %v612
      %690 = vmatprep.subr.bf16.mxu0 0
      %691 = vmatpush1.bf16.msra.mxu0 %v613
      %692 = vmatprep.subr.bf16.mxu0 0
      %693 = vmatpush1.bf16.msra.mxu0 %v614
      %694 = vmatprep.subr.bf16.mxu0 0
      %695 = vmatpush1.bf16.msra.mxu0 %v615
      %696 = vmatprep.subr.bf16.mxu0 0
      %697 = vmatpush1.bf16.msra.mxu0 %v616
      %698 = vmatprep.subr.bf16.mxu0 0
      %699 = vmatpush1.bf16.msra.mxu0 %v617
      %700 = vmatprep.subr.bf16.mxu0 0
      %701 = vmatpush1.bf16.msra.mxu0 %v618
      %702 = vmatprep.subr.bf16.mxu0 0
      %703 = vmatpush1.bf16.msra.mxu0 %v619
      %704 = vmatprep.subr.bf16.mxu0 0
      %705 = vmatpush1.bf16.msra.mxu0 %v684
      %706 = vmatprep.subr.bf16.mxu0 0
      %707 = vmatpush1.bf16.msra.mxu0 0
      %708 = vmatprep.subr.bf16.mxu0 0
      %709 = vmatpush1.bf16.msra.mxu0 0
      %710 = vmatprep.subr.bf16.mxu0 0
      %711 = vmatpush1.bf16.msra.mxu0 0
      %712 = vmatprep.subr.bf16.mxu0 0
      %713 = vmatpush1.bf16.msra.mxu0 0
      %714 = vmatprep.subr.bf16.mxu0 0
      %715 = vmatpush1.bf16.msra.mxu0 0
      %716 = vmatprep.subr.bf16.mxu0 0
      %717 = vmatpush1.bf16.msra.mxu0 0
      %718 = vmatprep.mubr.bf16.mxu0 %v632
      %719 = vmatmul.mubr.bf16.gmra.mrb[0].mxu0 %v525
      %v720 = vpop.f32.mrb[0].mxu0
      %v721 = vadd.f32 0.0, %v720
      %v722 = vpop.f32.mrb[0].mxu0
      %v723 = vpop.f32.mrb[0].mxu0
      %v724 = vadd.f32 0.0, %v723
      %v725 = vpop.f32.mrb[0].mxu0
      %726 = vmatprep.mubr.bf16.mxu0 %v635
      %727 = vmatmul.mubr.bf16.gmra.mrb[0].mxu0 %v527
      %v728 = vpop.f32.mrb[0].mxu0
      %v729 = vadd.f32 0.0, %v728
      %v730 = vpop.f32.mrb[0].mxu0
      %v731 = vpop.f32.mrb[0].mxu0
      %v732 = vadd.f32 0.0, %v731
      %v733 = vpop.f32.mrb[0].mxu0
      %734 = vmatprep.mubr.bf16.mxu0 %v638
      %735 = vmatmul.mubr.bf16.gmra.mrb[0].mxu0 %v529
      %v736 = vpop.f32.mrb[0].mxu0
      %v737 = vadd.f32 0.0, %v736
      %v738 = vpop.f32.mrb[0].mxu0
      %v739 = vpop.f32.mrb[0].mxu0
      %v740 = vadd.f32 0.0, %v739
      %v741 = vpop.f32.mrb[0].mxu0
      %742 = vmatprep.mubr.bf16.mxu0 %v641
      %743 = vmatmul.mubr.bf16.gmra.mrb[0].mxu0 %v531
      %v744 = vpop.f32.mrb[0].mxu0
      %v745 = vadd.f32 0.0, %v744
      %v746 = vpop.f32.mrb[0].mxu0
      %v747 = vpop.f32.mrb[0].mxu0
      %v748 = vadd.f32 0.0, %v747
      %v749 = vpop.f32.mrb[0].mxu0
      %750 = vmatprep.mubr.bf16.mxu0 %v644
      %751 = vmatmul.mubr.bf16.gmra.mrb[0].mxu0 %v533
      %v752 = vpop.f32.mrb[0].mxu0
      %v753 = vadd.f32 0.0, %v752
      %v754 = vpop.f32.mrb[0].mxu0
      %v755 = vpop.f32.mrb[0].mxu0
      %v756 = vadd.f32 0.0, %v755
      %v757 = vpop.f32.mrb[0].mxu0
      %758 = vmatprep.mubr.bf16.mxu0 %v647
      %759 = vmatmul.mubr.bf16.gmra.mrb[0].mxu0 %v535
      %v760 = vpop.f32.mrb[0].mxu0
      %v761 = vadd.f32 0.0, %v760
      %v762 = vpop.f32.mrb[0].mxu0
      %v763 = vpop.f32.mrb[0].mxu0
      %v764 = vadd.f32 0.0, %v763
      %v765 = vpop.f32.mrb[0].mxu0
      %766 = vmatprep.mubr.bf16.mxu0 %v650
      %767 = vmatmul.mubr.bf16.gmra.mrb[0].mxu0 %v537
      %v768 = vpop.f32.mrb[0].mxu0
      %v769 = vadd.f32 0.0, %v768
      %v770 = vpop.f32.mrb[0].mxu0
      %v771 = vpop.f32.mrb[0].mxu0
      %v772 = vadd.f32 0.0, %v771
      %v773 = vpop.f32.mrb[0].mxu0
      %774 = vmatprep.mubr.bf16.mxu0 %v653
      %775 = vmatmul.mubr.bf16.gmra.mrb[0].mxu0 %v539
      %v776 = vpop.f32.mrb[0].mxu0
      %v777 = vadd.f32 0.0, %v776
      %v778 = vpop.f32.mrb[0].mxu0
      %v779 = vpop.f32.mrb[0].mxu0
      %v780 = vadd.f32 0.0, %v779
      %v781 = vpop.f32.mrb[0].mxu0
      %782 = vmatprep.mubr.bf16.mxu0 %v656
      %783 = vmatmul.mubr.bf16.gmra.mrb[0].mxu0 %v541
      %v784 = vpop.f32.mrb[0].mxu0
      %v785 = vadd.f32 0.0, %v784
      %v786 = vpop.f32.mrb[0].mxu0
      %v787 = vpop.f32.mrb[0].mxu0
      %v788 = vadd.f32 0.0, %v787
      %v789 = vpop.f32.mrb[0].mxu0
      %790 = vmatprep.mubr.bf16.mxu0 %v659
      %791 = vmatmul.mubr.bf16.gmra.mrb[0].mxu0 %v543
      %v792 = vpop.f32.mrb[0].mxu0
      %v793 = vadd.f32 0.0, %v792
      %v794 = vpop.f32.mrb[0].mxu0
      %v795 = vpop.f32.mrb[0].mxu0
      %v796 = vadd.f32 0.0, %v795
      %v797 = vpop.f32.mrb[0].mxu0
      %798 = vmatprep.mubr.bf16.mxu0 %v662
      %799 = vmatmul.mubr.bf16.gmra.mrb[0].mxu0 %v545
      %v800 = vpop.f32.mrb[0].mxu0
      %v801 = vadd.f32 0.0, %v800
      %v802 = vpop.f32.mrb[0].mxu0
      %v803 = vpop.f32.mrb[0].mxu0
      %v804 = vadd.f32 0.0, %v803
      %v805 = vpop.f32.mrb[0].mxu0
      %806 = vmatprep.mubr.bf16.mxu0 %v665
      %807 = vmatmul.mubr.bf16.gmra.mrb[0].mxu0 %v547
      %v808 = vpop.f32.mrb[0].mxu0
      %v809 = vadd.f32 0.0, %v808
      %v810 = vpop.f32.mrb[0].mxu0
      %v811 = vpop.f32.mrb[0].mxu0
      %v812 = vadd.f32 0.0, %v811
      %v813 = vpop.f32.mrb[0].mxu0
      %814 = vmatprep.mubr.bf16.mxu0 %v668
      %815 = vmatmul.mubr.bf16.gmra.mrb[0].mxu0 %v549
      %v816 = vpop.f32.mrb[0].mxu0
      %v817 = vadd.f32 0.0, %v816
      %v818 = vpop.f32.mrb[0].mxu0
      %v819 = vpop.f32.mrb[0].mxu0
      %v820 = vadd.f32 0.0, %v819
      %v821 = vpop.f32.mrb[0].mxu0
      %822 = vmatprep.mubr.bf16.mxu0 %v671
      %823 = vmatmul.mubr.bf16.gmra.mrb[0].mxu0 %v551
      %v824 = vpop.f32.mrb[0].mxu0
      %v825 = vadd.f32 0.0, %v824
      %v826 = vpop.f32.mrb[0].mxu0
      %v827 = vpop.f32.mrb[0].mxu0
      %v828 = vadd.f32 0.0, %v827
      %v829 = vpop.f32.mrb[0].mxu0
      %830 = vmatprep.mubr.bf16.mxu0 %v674
      %831 = vmatmul.mubr.bf16.gmra.mrb[0].mxu0 %v553
      %v832 = vpop.f32.mrb[0].mxu0
      %v833 = vadd.f32 0.0, %v832
      %v834 = vpop.f32.mrb[0].mxu0
      %v835 = vpop.f32.mrb[0].mxu0
      %v836 = vadd.f32 0.0, %v835
      %v837 = vpop.f32.mrb[0].mxu0
      %838 = vmatprep.mubr.bf16.mxu0 %v677
      %839 = vmatmul.mubr.bf16.gmra.mrb[0].mxu0 %v555
      %v840 = vpop.f32.mrb[0].mxu0
      %v841 = vadd.f32 0.0, %v840
      %v842 = vpop.f32.mrb[0].mxu0
      %v843 = vpop.f32.mrb[0].mxu0
      %v844 = vadd.f32 0.0, %v843
      %v845 = vpop.f32.mrb[0].mxu0
      %846 = vdwg.mxu0
      %v847 = vadd.f32 %v346, %v721
      %v848 = vadd.f32 %v347, %v724
      %v849 = vadd.f32 %v348, %v729
      %v850 = vadd.f32 %v349, %v732
      %v851 = vadd.f32 %v350, %v737
      %v852 = vadd.f32 %v351, %v740
      %v853 = vadd.f32 %v352, %v745
      %v854 = vadd.f32 %v353, %v748
      %v855 = vadd.f32 %v354, %v753
      %v856 = vadd.f32 %v355, %v756
      %v857 = vadd.f32 %v356, %v761
      %v858 = vadd.f32 %v357, %v764
      %v859 = vadd.f32 %v358, %v769
      %v860 = vadd.f32 %v359, %v772
      %v861 = vadd.f32 %v360, %v777
      %v862 = vadd.f32 %v361, %v780
      %v863 = vadd.f32 %v362, %v785
      %v864 = vadd.f32 %v363, %v788
      %v865 = vadd.f32 %v364, %v793
      %v866 = vadd.f32 %v365, %v796
      %v867 = vadd.f32 %v366, %v801
      %v868 = vadd.f32 %v367, %v804
      %v869 = vadd.f32 %v368, %v809
      %v870 = vadd.f32 %v369, %v812
      %v871 = vadd.f32 %v370, %v817
      %v872 = vadd.f32 %v371, %v820
      %v873 = vadd.f32 %v372, %v825
      %v874 = vadd.f32 %v373, %v828
      %v875 = vadd.f32 %v374, %v833
      %v876 = vadd.f32 %v375, %v836
      %v877 = vadd.f32 %v376, %v841
      %v878 = vadd.f32 %v377, %v844
      %vm879 = vcmask 523264
      %880 = vst.msk [vmem:[#allocation2] sm:$0xff] %vm879, %v847
      %881 = vst.msk [vmem:[#allocation2 + $0x8] sm:$0xff] %vm879, %v848
      %882 = vst.msk [vmem:[#allocation2 + $0x10] sm:$0xff] %vm879, %v849
      %883 = vst.msk [vmem:[#allocation2 + $0x18] sm:$0xff] %vm879, %v850
      %884 = vst.msk [vmem:[#allocation2 + $0x20] sm:$0xff] %vm879, %v851
      %885 = vst.msk [vmem:[#allocation2 + $0x28] sm:$0xff] %vm879, %v852
      %886 = vst.msk [vmem:[#allocation2 + $0x30] sm:$0xff] %vm879, %v853
      %887 = vst.msk [vmem:[#allocation2 + $0x38] sm:$0xff] %vm879, %v854
      %888 = vst.msk [vmem:[#allocation2 + $0x40] sm:$0xff] %vm879, %v855
      %889 = vst.msk [vmem:[#allocation2 + $0x48] sm:$0xff] %vm879, %v856
      %890 = vst.msk [vmem:[#allocation2 + $0x50] sm:$0xff] %vm879, %v857
      %891 = vst.msk [vmem:[#allocation2 + $0x58] sm:$0xff] %vm879, %v858
      %892 = vst.msk [vmem:[#allocation2 + $0x60] sm:$0xff] %vm879, %v859
      %893 = vst.msk [vmem:[#allocation2 + $0x68] sm:$0xff] %vm879, %v860
      %894 = vst.msk [vmem:[#allocation2 + $0x70] sm:$0xff] %vm879, %v861
      %895 = vst.msk [vmem:[#allocation2 + $0x78] sm:$0xff] %vm879, %v862
      %896 = vst.msk [vmem:[#allocation2 + $0x80] sm:$0xff] %vm879, %v863
      %897 = vst.msk [vmem:[#allocation2 + $0x88] sm:$0xff] %vm879, %v864
      %898 = vst.msk [vmem:[#allocation2 + $0x90] sm:$0xff] %vm879, %v865
      %899 = vst.msk [vmem:[#allocation2 + $0x98] sm:$0xff] %vm879, %v866
      %900 = vst.msk [vmem:[#allocation2 + $0xa0] sm:$0xff] %vm879, %v867
      %901 = vst.msk [vmem:[#allocation2 + $0xa8] sm:$0xff] %vm879, %v868
      %902 = vst.msk [vmem:[#allocation2 + $0xb0] sm:$0xff] %vm879, %v869
      %903 = vst.msk [vmem:[#allocation2 + $0xb8] sm:$0xff] %vm879, %v870
      %904 = vst.msk [vmem:[#allocation2 + $0xc0] sm:$0xff] %vm879, %v871
      %905 = vst.msk [vmem:[#allocation2 + $0xc8] sm:$0xff] %vm879, %v872
      %906 = vst.msk [vmem:[#allocation2 + $0xd0] sm:$0xff] %vm879, %v873
      %907 = vst.msk [vmem:[#allocation2 + $0xd8] sm:$0xff] %vm879, %v874
      %908 = vst.msk [vmem:[#allocation2 + $0xe0] sm:$0xff] %vm879, %v875
      %909 = vst.msk [vmem:[#allocation2 + $0xe8] sm:$0xff] %vm879, %v876
      %910 = vst.msk [vmem:[#allocation2 + $0xf0] sm:$0xff] %vm879, %v877
      %911 = vst.msk [vmem:[#allocation2 + $0xf8] sm:$0xff] %vm879, %v878
      // Predicated region
      $region41: #{matmul_fused.1} parent=35 // pred_check
        %p912 = pneg %p309
      $region42: #{matmul_fused.1} parent=35 // pred_check_branch
        %914 = sbr.rel (%p912) target = $region44
      $region43: #{matmul_fused.1} parent=35 // pred_region
        %v915 = vld [vmem:[#allocation2] sm:$0xff]
        %v916 = vld [vmem:[#allocation2 + $0x8] sm:$0xff]
        %v917 = vld [vmem:[#allocation2 + $0x10] sm:$0xff]
        %v918 = vld [vmem:[#allocation2 + $0x18] sm:$0xff]
        %v919 = vld [vmem:[#allocation2 + $0x20] sm:$0xff]
        %v920 = vld [vmem:[#allocation2 + $0x28] sm:$0xff]
        %v921 = vld [vmem:[#allocation2 + $0x30] sm:$0xff]
        %v922 = vld [vmem:[#allocation2 + $0x38] sm:$0xff]
        %v923 = vld [vmem:[#allocation2 + $0x40] sm:$0xff]
        %v924 = vld [vmem:[#allocation2 + $0x48] sm:$0xff]
        %v925 = vld [vmem:[#allocation2 + $0x50] sm:$0xff]
        %v926 = vld [vmem:[#allocation2 + $0x58] sm:$0xff]
        %v927 = vld [vmem:[#allocation2 + $0x60] sm:$0xff]
        %v928 = vld [vmem:[#allocation2 + $0x68] sm:$0xff]
        %v929 = vld [vmem:[#allocation2 + $0x70] sm:$0xff]
        %v930 = vld [vmem:[#allocation2 + $0x78] sm:$0xff]
        %v931 = vld [vmem:[#allocation2 + $0x80] sm:$0xff]
        %v932 = vld [vmem:[#allocation2 + $0x88] sm:$0xff]
        %v933 = vld [vmem:[#allocation2 + $0x90] sm:$0xff]
        %v934 = vld [vmem:[#allocation2 + $0x98] sm:$0xff]
        %v935 = vld [vmem:[#allocation2 + $0xa0] sm:$0xff]
        %v936 = vld [vmem:[#allocation2 + $0xa8] sm:$0xff]
        %v937 = vld [vmem:[#allocation2 + $0xb0] sm:$0xff]
        %v938 = vld [vmem:[#allocation2 + $0xb8] sm:$0xff]
        %v939 = vld [vmem:[#allocation2 + $0xc0] sm:$0xff]
        %v940 = vld [vmem:[#allocation2 + $0xc8] sm:$0xff]
        %v941 = vld [vmem:[#allocation2 + $0xd0] sm:$0xff]
        %v942 = vld [vmem:[#allocation2 + $0xd8] sm:$0xff]
        %v943 = vld [vmem:[#allocation2 + $0xe0] sm:$0xff]
        %v944 = vld [vmem:[#allocation2 + $0xe8] sm:$0xff]
        %v945 = vld [vmem:[#allocation2 + $0xf0] sm:$0xff]
        %v946 = vld [vmem:[#allocation2 + $0xf8] sm:$0xff]
        %v947 = vld [vmem:[%s295] sm:$0x1]
        %v949 = vlaneseq
        %v950 = vshrl.u32 %v949, 7
        %v951 = vsub.s32 0, %v950
        %v952 = vrot.slane %v947, %v951
        %v954 = vmul.f32 %v915, %v952
        %v955 = vmul.f32 %v916, %v952
        %v956 = vmul.f32 %v917, %v952
        %v957 = vmul.f32 %v918, %v952
        %v958 = vmul.f32 %v919, %v952
        %v959 = vmul.f32 %v920, %v952
        %v960 = vmul.f32 %v921, %v952
        %v961 = vmul.f32 %v922, %v952
        %v962 = vmul.f32 %v923, %v952
        %v963 = vmul.f32 %v924, %v952
        %v964 = vmul.f32 %v925, %v952
        %v965 = vmul.f32 %v926, %v952
        %v966 = vmul.f32 %v927, %v952
        %v967 = vmul.f32 %v928, %v952
        %v968 = vmul.f32 %v929, %v952
        %v969 = vmul.f32 %v930, %v952
        %v970 = vmul.f32 %v931, %v952
        %v971 = vmul.f32 %v932, %v952
        %v972 = vmul.f32 %v933, %v952
        %v973 = vmul.f32 %v934, %v952
        %v974 = vmul.f32 %v935, %v952
        %v975 = vmul.f32 %v936, %v952
        %v976 = vmul.f32 %v937, %v952
        %v977 = vmul.f32 %v938, %v952
        %v978 = vmul.f32 %v939, %v952
        %v979 = vmul.f32 %v940, %v952
        %v980 = vmul.f32 %v941, %v952
        %v981 = vmul.f32 %v942, %v952
        %v982 = vmul.f32 %v943, %v952
        %v983 = vmul.f32 %v944, %v952
        %v984 = vmul.f32 %v945, %v952
        %v985 = vmul.f32 %v946, %v952
        %v986 = vld [vmem:[%s298] sm:$0x1]
        %v988 = vlaneseq
        %v989 = vshrl.u32 %v988, 7
        %v990 = vsub.s32 0, %v989
        %v991 = vrot.slane %v986, %v990
        %v993 = vadd.f32 %v954, %v991
        %v994 = vadd.f32 %v955, %v991
        %v995 = vadd.f32 %v956, %v991
        %v996 = vadd.f32 %v957, %v991
        %v997 = vadd.f32 %v958, %v991
        %v998 = vadd.f32 %v959, %v991
        %v999 = vadd.f32 %v960, %v991
        %v1000 = vadd.f32 %v961, %v991
        %v1001 = vadd.f32 %v962, %v991
        %v1002 = vadd.f32 %v963, %v991
        %v1003 = vadd.f32 %v964, %v991
        %v1004 = vadd.f32 %v965, %v991
        %v1005 = vadd.f32 %v966, %v991
        %v1006 = vadd.f32 %v967, %v991
        %v1007 = vadd.f32 %v968, %v991
        %v1008 = vadd.f32 %v969, %v991
        %v1009 = vadd.f32 %v970, %v991
        %v1010 = vadd.f32 %v971, %v991
        %v1011 = vadd.f32 %v972, %v991
        %v1012 = vadd.f32 %v973, %v991
        %v1013 = vadd.f32 %v974, %v991
        %v1014 = vadd.f32 %v975, %v991
        %v1015 = vadd.f32 %v976, %v991
        %v1016 = vadd.f32 %v977, %v991
        %v1017 = vadd.f32 %v978, %v991
        %v1018 = vadd.f32 %v979, %v991
        %v1019 = vadd.f32 %v980, %v991
        %v1020 = vadd.f32 %v981, %v991
        %v1021 = vadd.f32 %v982, %v991
        %v1022 = vadd.f32 %v983, %v991
        %v1023 = vadd.f32 %v984, %v991
        %v1024 = vadd.f32 %v985, %v991
        %v1025 = vmax.f32 %v993, 0.0
        %v1026 = vmax.f32 %v994, 0.0
        %v1027 = vmax.f32 %v995, 0.0
        %v1028 = vmax.f32 %v996, 0.0
        %v1029 = vmax.f32 %v997, 0.0
        %v1030 = vmax.f32 %v998, 0.0
        %v1031 = vmax.f32 %v999, 0.0
        %v1032 = vmax.f32 %v1000, 0.0
        %v1033 = vmax.f32 %v1001, 0.0
        %v1034 = vmax.f32 %v1002, 0.0
        %v1035 = vmax.f32 %v1003, 0.0
        %v1036 = vmax.f32 %v1004, 0.0
        %v1037 = vmax.f32 %v1005, 0.0
        %v1038 = vmax.f32 %v1006, 0.0
        %v1039 = vmax.f32 %v1007, 0.0
        %v1040 = vmax.f32 %v1008, 0.0
        %v1041 = vmax.f32 %v1009, 0.0
        %v1042 = vmax.f32 %v1010, 0.0
        %v1043 = vmax.f32 %v1011, 0.0
        %v1044 = vmax.f32 %v1012, 0.0
        %v1045 = vmax.f32 %v1013, 0.0
        %v1046 = vmax.f32 %v1014, 0.0
        %v1047 = vmax.f32 %v1015, 0.0
        %v1048 = vmax.f32 %v1016, 0.0
        %v1049 = vmax.f32 %v1017, 0.0
        %v1050 = vmax.f32 %v1018, 0.0
        %v1051 = vmax.f32 %v1019, 0.0
        %v1052 = vmax.f32 %v1020, 0.0
        %v1053 = vmax.f32 %v1021, 0.0
        %v1054 = vmax.f32 %v1022, 0.0
        %v1055 = vmax.f32 %v1023, 0.0
        %v1056 = vmax.f32 %v1024, 0.0
        %v1057 = vpack.c.bf16 %v1026, %v1025
        %v1058 = vpack.c.bf16 %v1028, %v1027
        %v1059 = vpack.c.bf16 %v1030, %v1029
        %v1060 = vpack.c.bf16 %v1032, %v1031
        %v1061 = vpack.c.bf16 %v1034, %v1033
        %v1062 = vpack.c.bf16 %v1036, %v1035
        %v1063 = vpack.c.bf16 %v1038, %v1037
        %v1064 = vpack.c.bf16 %v1040, %v1039
        %v1065 = vpack.c.bf16 %v1042, %v1041
        %v1066 = vpack.c.bf16 %v1044, %v1043
        %v1067 = vpack.c.bf16 %v1046, %v1045
        %v1068 = vpack.c.bf16 %v1048, %v1047
        %v1069 = vpack.c.bf16 %v1050, %v1049
        %v1070 = vpack.c.bf16 %v1052, %v1051
        %v1071 = vpack.c.bf16 %v1054, %v1053
        %v1072 = vpack.c.bf16 %v1056, %v1055
        %v1089 = vunpack.c.l.b16 %v1057
        %v1090 = vunpack.c.h.b16 %v1057
        %v1091 = vunpack.c.l.b16 %v1058
        %v1092 = vunpack.c.h.b16 %v1058
        %v1093 = vunpack.c.l.b16 %v1059
        %v1094 = vunpack.c.h.b16 %v1059
        %v1095 = vunpack.c.l.b16 %v1060
        %v1096 = vunpack.c.h.b16 %v1060
        %v1097 = vunpack.c.l.b16 %v1061
        %v1098 = vunpack.c.h.b16 %v1061
        %v1099 = vunpack.c.l.b16 %v1062
        %v1100 = vunpack.c.h.b16 %v1062
        %v1101 = vunpack.c.l.b16 %v1063
        %v1102 = vunpack.c.h.b16 %v1063
        %v1103 = vunpack.c.l.b16 %v1064
        %v1104 = vunpack.c.h.b16 %v1064
        %v1105 = vunpack.c.l.b16 %v1065
        %v1106 = vunpack.c.h.b16 %v1065
        %v1107 = vunpack.c.l.b16 %v1066
        %v1108 = vunpack.c.h.b16 %v1066
        %v1109 = vunpack.c.l.b16 %v1067
        %v1110 = vunpack.c.h.b16 %v1067
        %v1111 = vunpack.c.l.b16 %v1068
        %v1112 = vunpack.c.h.b16 %v1068
        %v1113 = vunpack.c.l.b16 %v1069
        %v1114 = vunpack.c.h.b16 %v1069
        %v1115 = vunpack.c.l.b16 %v1070
        %v1116 = vunpack.c.h.b16 %v1070
        %v1117 = vunpack.c.l.b16 %v1071
        %v1118 = vunpack.c.h.b16 %v1071
        %v1119 = vunpack.c.l.b16 %v1072
        %v1120 = vunpack.c.h.b16 %v1072
        %v1121 = vpack.c.b16 %v1089, %v1089
        %v1122 = vpack.c.b16 %v1090, %v1090
        %v1123 = vpack.c.b16 %v1091, %v1091
        %v1124 = vpack.c.b16 %v1092, %v1092
        %v1125 = vpack.c.b16 %v1093, %v1093
        %v1126 = vpack.c.b16 %v1094, %v1094
        %v1127 = vpack.c.b16 %v1095, %v1095
        %v1128 = vpack.c.b16 %v1096, %v1096
        %v1129 = vpack.c.b16 %v1097, %v1097
        %v1130 = vpack.c.b16 %v1098, %v1098
        %v1131 = vpack.c.b16 %v1099, %v1099
        %v1132 = vpack.c.b16 %v1100, %v1100
        %v1133 = vpack.c.b16 %v1101, %v1101
        %v1134 = vpack.c.b16 %v1102, %v1102
        %v1135 = vpack.c.b16 %v1103, %v1103
        %v1136 = vpack.c.b16 %v1104, %v1104
        %v1137 = vpack.c.b16 %v1105, %v1105
        %v1138 = vpack.c.b16 %v1106, %v1106
        %v1139 = vpack.c.b16 %v1107, %v1107
        %v1140 = vpack.c.b16 %v1108, %v1108
        %v1141 = vpack.c.b16 %v1109, %v1109
        %v1142 = vpack.c.b16 %v1110, %v1110
        %v1143 = vpack.c.b16 %v1111, %v1111
        %v1144 = vpack.c.b16 %v1112, %v1112
        %v1145 = vpack.c.b16 %v1113, %v1113
        %v1146 = vpack.c.b16 %v1114, %v1114
        %v1147 = vpack.c.b16 %v1115, %v1115
        %v1148 = vpack.c.b16 %v1116, %v1116
        %v1149 = vpack.c.b16 %v1117, %v1117
        %v1150 = vpack.c.b16 %v1118, %v1118
        %v1151 = vpack.c.b16 %v1119, %v1119
        %v1152 = vpack.c.b16 %v1120, %v1120
        %vm1185 = vcmask 519168
        %1186 = vst.msk [vmem:[%s306] sm:$0xf] %vm1185, %v1121
        %1187 = vst.msk [vmem:[%s306 + $0x4] sm:$0xf] %vm1185, %v1122
        %1188 = vst.msk [vmem:[%s306 + $0x8] sm:$0xf] %vm1185, %v1123
        %1189 = vst.msk [vmem:[%s306 + $0xc] sm:$0xf] %vm1185, %v1124
        %1190 = vst.msk [vmem:[%s306 + $0x10] sm:$0xf] %vm1185, %v1125
        %1191 = vst.msk [vmem:[%s306 + $0x14] sm:$0xf] %vm1185, %v1126
        %1192 = vst.msk [vmem:[%s306 + $0x18] sm:$0xf] %vm1185, %v1127
        %1193 = vst.msk [vmem:[%s306 + $0x1c] sm:$0xf] %vm1185, %v1128
        %1194 = vst.msk [vmem:[%s306 + $0x20] sm:$0xf] %vm1185, %v1129
        %1195 = vst.msk [vmem:[%s306 + $0x24] sm:$0xf] %vm1185, %v1130
        %1196 = vst.msk [vmem:[%s306 + $0x28] sm:$0xf] %vm1185, %v1131
        %1197 = vst.msk [vmem:[%s306 + $0x2c] sm:$0xf] %vm1185, %v1132
        %1198 = vst.msk [vmem:[%s306 + $0x30] sm:$0xf] %vm1185, %v1133
        %1199 = vst.msk [vmem:[%s306 + $0x34] sm:$0xf] %vm1185, %v1134
        %1200 = vst.msk [vmem:[%s306 + $0x38] sm:$0xf] %vm1185, %v1135
        %1201 = vst.msk [vmem:[%s306 + $0x3c] sm:$0xf] %vm1185, %v1136
        %1202 = vst.msk [vmem:[%s306 + $0x40] sm:$0xf] %vm1185, %v1137
        %1203 = vst.msk [vmem:[%s306 + $0x44] sm:$0xf] %vm1185, %v1138
        %1204 = vst.msk [vmem:[%s306 + $0x48] sm:$0xf] %vm1185, %v1139
        %1205 = vst.msk [vmem:[%s306 + $0x4c] sm:$0xf] %vm1185, %v1140
        %1206 = vst.msk [vmem:[%s306 + $0x50] sm:$0xf] %vm1185, %v1141
        %1207 = vst.msk [vmem:[%s306 + $0x54] sm:$0xf] %vm1185, %v1142
        %1208 = vst.msk [vmem:[%s306 + $0x58] sm:$0xf] %vm1185, %v1143
        %1209 = vst.msk [vmem:[%s306 + $0x5c] sm:$0xf] %vm1185, %v1144
        %1210 = vst.msk [vmem:[%s306 + $0x60] sm:$0xf] %vm1185, %v1145
        %1211 = vst.msk [vmem:[%s306 + $0x64] sm:$0xf] %vm1185, %v1146
        %1212 = vst.msk [vmem:[%s306 + $0x68] sm:$0xf] %vm1185, %v1147
        %1213 = vst.msk [vmem:[%s306 + $0x6c] sm:$0xf] %vm1185, %v1148
        %1214 = vst.msk [vmem:[%s306 + $0x70] sm:$0xf] %vm1185, %v1149
        %1215 = vst.msk [vmem:[%s306 + $0x74] sm:$0xf] %vm1185, %v1150
        %1216 = vst.msk [vmem:[%s306 + $0x78] sm:$0xf] %vm1185, %v1151
        %1217 = vst.msk [vmem:[%s306 + $0x7c] sm:$0xf] %vm1185, %v1152
      $region44: #{matmul_fused.1} parent=35 // pred_fallthru
        _
      %s1218 = smul.u32 32, %s20
      %p1219 = scmp.lt.s32.totalorder %s1218, 63
      %s1220 = scalar_select %p1219, %s1218, 63
      %p1221 = scmp.lt.s32.totalorder %s21, 0
      %s1222 = scalar_select %p1221, %s21, 0
      %s1223 = sadd.s32 %s1222, %s1220
      %s1224 = smul.addr %s1223, 4
      %s1225 = scalar_lea.vmem %s4, %s1224
      // Predicated region
      $region45: #{matmul_fused.1} parent=35 // pred_check
        %p1226 = pneg %p162
      $region46: #{matmul_fused.1} parent=35 // pred_check_branch
        %1228 = sbr.rel (%p1226) target = $region48
      $region47: #{matmul_fused.1} parent=35 // pred_region
        %s1229 = smul.u32 32, %s20
      $region48: #{matmul_fused.1} parent=35 // pred_fallthru
        _
    $region36: #{matmul_fused.1} parent=5 // pred_fallthru
      _
    %p1230 = scmp.le.s32.totalorder 2, %s10
    // Predicated region
    $region49: #{matmul_fused.1} parent=5 // pred_check
      %p1231 = pneg %p1230
    $region50: #{matmul_fused.1} parent=5 // pred_check_branch
      %1233 = sbr.rel (%p1231) target = $region52
    $region51: #{matmul_fused.1} parent=5 // pred_region
      %s1234 = ssub.s32 %s10, 2
      // Predicated region
      $region53: #{matmul_fused.1} parent=51 // pred_check
        %p1235 = pneg %p168
      $region54: #{matmul_fused.1} parent=51 // pred_check_branch
        %1237 = sbr.rel (%p1235) target = $region56
      $region55: #{matmul_fused.1} parent=51 // pred_region
        %s1238 = smul.u32 32, %s23
        %p1239 = scmp.lt.s32.totalorder %s1238, 63
        %s1240 = scalar_select %p1239, %s1238, 63
        %p1241 = scmp.lt.s32.totalorder %s24, 0
        %s1242 = scalar_select %p1241, %s24, 0
        %s1243 = sadd.s32 %s1242, %s1240
        %s1244 = smul.addr %s1243, 4
        %s1245 = scalar_lea.vmem %s4, %s1244
      $region56: #{matmul_fused.1} parent=51 // pred_fallthru
        _
    $region52: #{matmul_fused.1} parent=5 // pred_fallthru
      _
  $region6: #{matmul_fused.1} parent=0 // loop_footer
    %s14 = sadd.s32 1, %s10
  $region7: #{matmul_fused.1} parent=0 // loop_footer_branch
    %9 = sbr.rel target = $region3
  $region8: #{matmul_fused.1} parent=0 // loop_exit
    _

</llo_original>
